<compile_context>
chip_gen: v7x
topology: tpu7x:2x2x1
jax: 0.10.0
libtpu: 0.0.40
codegen_flags: <defaults>
</compile_context>

<pallas_src>
import functools

import jax
import jax.numpy as jnp
from jax import lax
from jax.experimental import pallas as pl
from jax.experimental.pallas import tpu as pltpu


def _round_up(x, m):
    return ((x + m - 1) // m) * m


def _device_kind():
    try:
        return jax.devices()[0].device_kind.lower()
    except Exception:
        return ""


def _vmem_capacity_bytes(kind):
    try:
        cap = getattr(pltpu.get_tpu_info(), "vmem_capacity_bytes", None)
        if cap:
            return int(cap)
    except Exception:
        pass
    # Fallback: v7x has 64 MiB per TensorCore, earlier gens 128 MiB.
    return (64 if ("v7" in kind or "7x" in kind) else 128) * 1024 * 1024


def _gelu(h, approximate):
    if approximate:
        return jax.nn.gelu(h, approximate=True)          # tanh approx -> EUP slot
    # Exact erf GELU: matches nn.GELU() default.
    return 0.5 * h * (1.0 + lax.erf(h * jnp.float32(0.7071067811865476)))


def _ffn_fullh_kernel(x_ref, g_ref, beta_ref, w1_ref, b1_ref, w2_ref, b2_ref,
                      o_ref, *, eps, approximate_gelu):
    """Single-pass kernel: full hidden dim in VMEM, 1-D grid over token tiles."""
    x = x_ref[...].astype(jnp.float32)
    mu = jnp.mean(x, axis=-1, keepdims=True)
    xc = x - mu
    var = jnp.mean(xc * xc, axis=-1, keepdims=True)          # biased, as nn.LayerNorm
    xn = xc * lax.rsqrt(var + eps)
    xn = xn * g_ref[...].astype(jnp.float32) + beta_ref[...].astype(jnp.float32)
    xn = xn.astype(w1_ref.dtype)                              # MXU dtype (bf16/f32)

    h = jnp.dot(xn, w1_ref[...], preferred_element_type=jnp.float32)
    h = h + b1_ref[...].astype(jnp.float32)
    h = _gelu(h, approximate_gelu)
    # TODO(synk): training-mode dropout (prng mask) intentionally omitted (p=0.0).

    y = jnp.dot(h.astype(w2_ref.dtype), w2_ref[...],
                preferred_element_type=jnp.float32)
    y = y + b2_ref[...].astype(jnp.float32)
    o_ref[...] = y.astype(o_ref.dtype)


def _ffn_reduce_kernel(x_ref, g_ref, beta_ref, w1_ref, b1_ref, w2_ref, b2_ref,
                       o_ref, xn_ref, acc_ref, *, eps, approximate_gelu):
    """Hidden-axis reduction kernel: grid = (token_tiles, hidden_tiles)."""
    k = pl.program_id(1)

    # Once per token tile: LayerNorm (f32 stats) + init accumulator with the
    # output bias (folds the final (TM, D) bias add into the zero fill).
    @pl.when(k == 0)
    def _():
        x = x_ref[...].astype(jnp.float32)
        mu = jnp.mean(x, axis=-1, keepdims=True)
        xc = x - mu
        var = jnp.mean(xc * xc, axis=-1, keepdims=True)
        xn = xc * lax.rsqrt(var + eps)
        xn = xn * g_ref[...].astype(jnp.float32) + beta_ref[...].astype(jnp.float32)
        xn_ref[...] = xn.astype(xn_ref.dtype)
        acc_ref[...] = jnp.broadcast_to(
            b2_ref[...].astype(jnp.float32), acc_ref.shape)

    # Linear(dim -> TH slice) + GELU, f32 accumulation.
    h = jnp.dot(xn_ref[...], w1_ref[...], preferred_element_type=jnp.float32)
    h = h + b1_ref[...].astype(jnp.float32)
    h = _gelu(h, approximate_gelu)
    # TODO(synk): training-mode dropout (prng mask) intentionally omitted (p=0.0).

    # Linear(TH slice -> dim), accumulated into the f32 scratch.
    acc_ref[...] += jnp.dot(h.astype(w2_ref.dtype), w2_ref[...],
                            preferred_element_type=jnp.float32)

    @pl.when(k == pl.num_programs(1) - 1)
    def _():
        o_ref[...] = acc_ref[...].astype(o_ref.dtype)


def feed_forward(x, gamma, beta, w1, b1, w2, b2, *, eps=1e-5,
                 block_rows=None, block_hidden=None,
                 compute_dtype=jnp.bfloat16, approximate_gelu=False):
    """x: (B, S, D) -> (B, S, D).  Weights stored (in, out): w1 (D, H), w2 (H, D)."""
    B, S, D = x.shape
    H = w1.shape[1]
    N = B * S

    kind = _device_kind()
    n_cores = 2 if ("v7" in kind or "7x" in kind) else 1      # v7x: 2 TCs / chip
    vmem_budget = int(_vmem_capacity_bytes(kind) * 0.85)      # 15% headroom

    # MXU dtype: default bf16 (halves weight DMA, native MXU rate on all gens);
    # accumulation is always f32.  compute_dtype=None keeps the input dtype.
    if compute_dtype is not None:
        w1 = w1.astype(compute_dtype)
        w2 = w2.astype(compute_dtype)
    mxu_dtype = w1.dtype
    w_bpe = jnp.dtype(mxu_dtype).itemsize
    x_bpe = jnp.dtype(x.dtype).itemsize
    row_align = 16 if w_bpe < 4 else 8        # bf16 packs 16 sublanes per vreg

    # Token tile: big enough to amortize the (re-)fetched weight slices
    # (weight-DMA roofline), split across TensorCores on multi-core chips so the
    # "parallel" axis actually spans both cores.
    if block_rows is None:
        target = 1024 if "v6" in kind else 512
        block_rows = min(target, _round_up(pl.cdiv(N, n_cores), row_align))
    block_rows = _round_up(min(block_rows, _round_up(N, row_align)), row_align)
    n_pad = _round_up(N, block_rows)

    # Resident-VMEM estimates: double-buffered inputs/outputs, 8-sublane padding
    # on the (1, F) bias blocks, plus the f32 compute intermediates.
    def est_fullh(tm):
        return (2 * tm * D * x_bpe            # x tile
                + 2 * tm * D * x_bpe          # out tile
                + 2 * D * H * w_bpe           # w1 (grid-invariant, 2 bufs alloc'd)
                + 2 * H * D * w_bpe           # w2
                + 2 * 8 * H * 4               # b1 (sublane-padded)
                + 2 * 3 * 8 * D * 4           # gamma / beta / b2
                + tm * H * 4                  # hidden / GELU intermediate (f32)
                + 2 * tm * D * 4)             # LN temps (f32)

    def est_reduce(tm, th):
        return (2 * tm * D * x_bpe
                + 2 * tm * D * x_bpe
                + 2 * D * th * w_bpe          # w1 slice
                + 2 * th * D * w_bpe          # w2 slice
                + 2 * 8 * th * 4              # b1 slice (sublane-padded)
                + 2 * 3 * 8 * D * 4
                + tm * D * w_bpe              # xn scratch
                + tm * D * 4                  # f32 accumulator
                + tm * th * 4                 # GELU intermediate (f32)
                + 2 * tm * D * 4)             # LN temps at k == 0

    # Hidden tile: prefer the full-H single-pass kernel (weights DMA'd once per
    # kernel, no accumulator RMW, no per-k-step overhead) when it fits; else the
    # largest >= 128-lane slice that fits the budget.
    if block_hidden is None:
        if est_fullh(block_rows) <= vmem_budget:
            block_hidden = H
        else:
            cands = [c for c in (2048, 1024, 768, 512, 384, 256, 128)
                     if H % c == 0 and c < H]
            block_hidden = cands[-1] if cands else H
            for c in cands:
                if est_reduce(block_rows, c) <= vmem_budget:
                    block_hidden = c
                    break
    if H % block_hidden != 0 or (block_hidden != H and block_hidden % 128 != 0):
        block_hidden = H

    x2 = x.reshape(N, D)
    if n_pad != N:
        x2 = jnp.pad(x2, ((0, n_pad - N), (0, 0)))

    # LN params / biases presented as (1, features) so they broadcast in-kernel.
    gamma2 = gamma.reshape(1, D)
    beta2 = beta.reshape(1, D)
    b1_2 = b1.reshape(1, H)
    b2_2 = b2.reshape(1, D)

    row_tiles = n_pad // block_rows

    if block_hidden == H:
        est = est_fullh(block_rows)
        grid_spec = pltpu.PrefetchScalarGridSpec(
            num_scalar_prefetch=0,
            grid=(row_tiles,),
            in_specs=[
                pl.BlockSpec((block_rows, D), lambda i: (i, 0)),   # x tile
                pl.BlockSpec((1, D), lambda i: (0, 0)),            # gamma
                pl.BlockSpec((1, D), lambda i: (0, 0)),            # beta
                pl.BlockSpec((D, H), lambda i: (0, 0)),            # w1 (invariant)
                pl.BlockSpec((1, H), lambda i: (0, 0)),            # b1
                pl.BlockSpec((H, D), lambda i: (0, 0)),            # w2 (invariant)
                pl.BlockSpec((1, D), lambda i: (0, 0)),            # b2
            ],
            out_specs=pl.BlockSpec((block_rows, D), lambda i: (i, 0)),
            scratch_shapes=[])
        kernel = functools.partial(_ffn_fullh_kernel, eps=eps,
                                   approximate_gelu=approximate_gelu)
        dim_sem = ("parallel",)
    else:
        est = est_reduce(block_rows, block_hidden)
        grid_spec = pltpu.PrefetchScalarGridSpec(
            num_scalar_prefetch=0,
            grid=(row_tiles, H // block_hidden),
            in_specs=[
                pl.BlockSpec((block_rows, D), lambda i, k: (i, 0)),    # x tile
                pl.BlockSpec((1, D), lambda i, k: (0, 0)),             # gamma
                pl.BlockSpec((1, D), lambda i, k: (0, 0)),             # beta
                pl.BlockSpec((D, block_hidden), lambda i, k: (0, k)),  # w1 slice
                pl.BlockSpec((1, block_hidden), lambda i, k: (0, k)),  # b1 slice
                pl.BlockSpec((block_hidden, D), lambda i, k: (k, 0)),  # w2 slice
                pl.BlockSpec((1, D), lambda i, k: (0, 0)),             # b2
            ],
            out_specs=pl.BlockSpec((block_rows, D), lambda i, k: (i, 0)),
            scratch_shapes=[
                pltpu.VMEM((block_rows, D), mxu_dtype),    # normalized activations
                pltpu.VMEM((block_rows, D), jnp.float32),  # matmul2 accumulator
            ])
        kernel = functools.partial(_ffn_reduce_kernel, eps=eps,
                                   approximate_gelu=approximate_gelu)
        dim_sem = ("parallel", "arbitrary")

    vmem_limit = int(min(max(int(est * 1.25), 32 * 1024 * 1024), vmem_budget))

    out = pl.pallas_call(
        kernel,
        out_shape=jax.ShapeDtypeStruct((n_pad, D), x.dtype),
        grid_spec=grid_spec,
        compiler_params=pltpu.CompilerParams(
            dimension_semantics=dim_sem,
            vmem_limit_bytes=vmem_limit),
    )(x2, gamma2, beta2, w1, b1_2, w2, b2_2)

    return out[:N].reshape(B, S, D)


def reference_feed_forward(x, gamma, beta, w1, b1, w2, b2, eps=1e-5):
    xf = x.astype(jnp.float32)
    mu = jnp.mean(xf, axis=-1, keepdims=True)
    var = jnp.mean((xf - mu) ** 2, axis=-1, keepdims=True)
    xn = (xf - mu) * lax.rsqrt(var + eps) * gamma + beta
    h = xn @ w1 + b1
    h = 0.5 * h * (1.0 + lax.erf(h / jnp.sqrt(2.0)))
    return (h @ w2 + b2).astype(x.dtype)


if __name__ == "__main__":
    key = jax.random.PRNGKey(0)
    # Small ViT-like shapes; odd token count (2 * 23 = 46) exercises tail padding.
    B, S, D, HID = 2, 23, 64, 256

    k_x, k_w1, k_b1, k_w2, k_b2, k_g, k_beta = jax.random.split(key, 7)
    x = jax.random.normal(k_x, (B, S, D), dtype=jnp.float32)
    gamma = 1.0 + 0.1 * jax.random.normal(k_g, (D,), dtype=jnp.float32)
    beta = 0.1 * jax.random.normal(k_beta, (D,), dtype=jnp.float32)
    # nn.Linear stores (out, in); we keep (in, out) for row-major MXU matmuls.
    w1 = jax.random.normal(k_w1, (D, HID), dtype=jnp.float32) * (1.0 / D ** 0.5)
    b1 = 0.02 * jax.random.normal(k_b1, (HID,), dtype=jnp.float32)
    w2 = jax.random.normal(k_w2, (HID, D), dtype=jnp.float32) * (1.0 / HID ** 0.5)
    b2 = 0.02 * jax.random.normal(k_b2, (D,), dtype=jnp.float32)

    y_ref = reference_feed_forward(x, gamma, beta, w1, b1, w2, b2)

    # Default path: bf16 MXU dtype, auto tiles (full-H single-pass kernel here).
    y = feed_forward(x, gamma, beta, w1, b1, w2, b2)
    y = jax.block_until_ready(y)
    assert y.shape == (B, S, D), y.shape
    err = float(jnp.max(jnp.abs(y - y_ref)))
    assert err < 1e-1, f"bf16 default path max abs err {err}"

    # f32 MXU path, full-H kernel: tight tolerance.
    y32 = feed_forward(x, gamma, beta, w1, b1, w2, b2, compute_dtype=None)
    y32 = jax.block_until_ready(y32)
    err32 = float(jnp.max(jnp.abs(y32 - y_ref)))
    assert err32 < 1e-4, f"f32 full-H path max abs err {err32}"

    # f32, forced hidden-axis reduction kernel (block_hidden < H) + tail padding.
    y_red = feed_forward(x, gamma, beta, w1, b1, w2, b2, compute_dtype=None,
                         block_rows=16, block_hidden=128)
    y_red = jax.block_until_ready(y_red)
    err_red = float(jnp.max(jnp.abs(y_red - y_ref)))
    assert err_red < 1e-4, f"f32 reduction path max abs err {err_red}"

    print("KERNEL_OK")
</pallas_src>

<mosaic_0001>
module attributes {stable_mosaic.version = 11 : i64} {
  func.func @_ffn_fullh_kernel(%arg0: i32, %arg1: memref<48x64xf32, #tpu.memory_space<vmem>>, %arg2: memref<1x64xf32, #tpu.memory_space<vmem>>, %arg3: memref<1x64xf32, #tpu.memory_space<vmem>>, %arg4: memref<64x256xbf16, #tpu.memory_space<vmem>>, %arg5: memref<1x256xf32, #tpu.memory_space<vmem>>, %arg6: memref<256x64xbf16, #tpu.memory_space<vmem>>, %arg7: memref<1x64xf32, #tpu.memory_space<vmem>>, %arg8: memref<48x64xf32, #tpu.memory_space<vmem>>) attributes {dimension_semantics = [#tpu.dimension_semantics<parallel>], iteration_bounds = array<i64: 1>, scalar_prefetch = 0 : i64, scratch_operands = 0 : i64, tpu.core_type = #tpu.core_type<tc>, window_params = [{transform_indices = @transform_0, window_bounds = array<i64: 48, 64>}, {pipeline_mode = #tpu.pipeline_mode<synchronous>, transform_indices = @transform_1, window_bounds = array<i64: 1, 64>}, {pipeline_mode = #tpu.pipeline_mode<synchronous>, transform_indices = @transform_2, window_bounds = array<i64: 1, 64>}, {pipeline_mode = #tpu.pipeline_mode<synchronous>, transform_indices = @transform_3, window_bounds = array<i64: 64, 256>}, {pipeline_mode = #tpu.pipeline_mode<synchronous>, transform_indices = @transform_4, window_bounds = array<i64: 1, 256>}, {pipeline_mode = #tpu.pipeline_mode<synchronous>, transform_indices = @transform_5, window_bounds = array<i64: 256, 64>}, {pipeline_mode = #tpu.pipeline_mode<synchronous>, transform_indices = @transform_6, window_bounds = array<i64: 1, 64>}, {transform_indices = @transform_7, window_bounds = array<i64: 48, 64>}]} {
    %c0 = arith.constant 0 : index
    %c0_0 = arith.constant 0 : index
    %0 = vector.load %arg1[%c0, %c0_0] : memref<48x64xf32, #tpu.memory_space<vmem>>, vector<48x64xf32>
    %cst = arith.constant dense<0.000000e+00> : vector<48xf32>
    %1 = vector.multi_reduction <add>, %0, %cst [1] : vector<48x64xf32> to vector<48xf32>
    %2 = vector.shape_cast %1 : vector<48xf32> to vector<48x1xf32>
    %cst_1 = arith.constant 6.400000e+01 : f32
    %3 = vector.broadcast %cst_1 : f32 to vector<48x1xf32>
    %4 = arith.divf %2, %3 : vector<48x1xf32>
    %5 = vector.broadcast %4 : vector<48x1xf32> to vector<48x64xf32>
    %6 = arith.subf %0, %5 : vector<48x64xf32>
    %7 = arith.mulf %6, %6 : vector<48x64xf32>
    %cst_2 = arith.constant dense<0.000000e+00> : vector<48xf32>
    %8 = vector.multi_reduction <add>, %7, %cst_2 [1] : vector<48x64xf32> to vector<48xf32>
    %9 = vector.shape_cast %8 : vector<48xf32> to vector<48x1xf32>
    %cst_3 = arith.constant 6.400000e+01 : f32
    %10 = vector.broadcast %cst_3 : f32 to vector<48x1xf32>
    %11 = arith.divf %9, %10 : vector<48x1xf32>
    %cst_4 = arith.constant 9.99999974E-6 : f32
    %12 = vector.broadcast %cst_4 : f32 to vector<48x1xf32>
    %13 = arith.addf %11, %12 : vector<48x1xf32>
    %14 = math.rsqrt %13 : vector<48x1xf32>
    %15 = vector.broadcast %14 : vector<48x1xf32> to vector<48x64xf32>
    %16 = arith.mulf %6, %15 : vector<48x64xf32>
    %c0_5 = arith.constant 0 : index
    %c0_6 = arith.constant 0 : index
    %17 = vector.load %arg2[%c0_5, %c0_6] : memref<1x64xf32, #tpu.memory_space<vmem>>, vector<1x64xf32>
    %18 = vector.broadcast %17 : vector<1x64xf32> to vector<48x64xf32>
    %19 = arith.mulf %16, %18 : vector<48x64xf32>
    %c0_7 = arith.constant 0 : index
    %c0_8 = arith.constant 0 : index
    %20 = vector.load %arg3[%c0_7, %c0_8] : memref<1x64xf32, #tpu.memory_space<vmem>>, vector<1x64xf32>
    %21 = vector.broadcast %20 : vector<1x64xf32> to vector<48x64xf32>
    %22 = arith.addf %19, %21 : vector<48x64xf32>
    %23 = arith.truncf %22 : vector<48x64xf32> to vector<48x64xbf16>
    %c0_9 = arith.constant 0 : index
    %c0_10 = arith.constant 0 : index
    %24 = vector.load %arg4[%c0_9, %c0_10] : memref<64x256xbf16, #tpu.memory_space<vmem>>, vector<64x256xbf16>
    %cst_11 = arith.constant dense<0.000000e+00> : vector<48x256xf32>
    %25 = tpu.matmul %23, %24, %cst_11 {dimension_numbers = #tpu.dot_dimension_numbers<[1], [0], [0], [1], [0, 0, 1, 1], [], []>} : vector<48x64xbf16>, vector<64x256xbf16>, vector<48x256xf32> -> vector<48x256xf32>
    %c0_12 = arith.constant 0 : index
    %c0_13 = arith.constant 0 : index
    %26 = vector.load %arg5[%c0_12, %c0_13] : memref<1x256xf32, #tpu.memory_space<vmem>>, vector<1x256xf32>
    %27 = vector.broadcast %26 : vector<1x256xf32> to vector<48x256xf32>
    %28 = arith.addf %25, %27 : vector<48x256xf32>
    %cst_14 = arith.constant 5.000000e-01 : f32
    %29 = vector.broadcast %cst_14 : f32 to vector<48x256xf32>
    %30 = arith.mulf %29, %28 : vector<48x256xf32>
    %cst_15 = arith.constant 0.707106769 : f32
    %31 = vector.broadcast %cst_15 : f32 to vector<48x256xf32>
    %32 = arith.mulf %28, %31 : vector<48x256xf32>
    %33 = math.erf %32 : vector<48x256xf32>
    %cst_16 = arith.constant 1.000000e+00 : f32
    %34 = vector.broadcast %cst_16 : f32 to vector<48x256xf32>
    %35 = arith.addf %34, %33 : vector<48x256xf32>
    %36 = arith.mulf %30, %35 : vector<48x256xf32>
    %37 = arith.truncf %36 : vector<48x256xf32> to vector<48x256xbf16>
    %c0_17 = arith.constant 0 : index
    %c0_18 = arith.constant 0 : index
    %38 = vector.load %arg6[%c0_17, %c0_18] : memref<256x64xbf16, #tpu.memory_space<vmem>>, vector<256x64xbf16>
    %cst_19 = arith.constant dense<0.000000e+00> : vector<48x64xf32>
    %39 = tpu.matmul %37, %38, %cst_19 {dimension_numbers = #tpu.dot_dimension_numbers<[1], [0], [0], [1], [0, 0, 1, 1], [], []>} : vector<48x256xbf16>, vector<256x64xbf16>, vector<48x64xf32> -> vector<48x64xf32>
    %c0_20 = arith.constant 0 : index
    %c0_21 = arith.constant 0 : index
    %40 = vector.load %arg7[%c0_20, %c0_21] : memref<1x64xf32, #tpu.memory_space<vmem>>, vector<1x64xf32>
    %41 = vector.broadcast %40 : vector<1x64xf32> to vector<48x64xf32>
    %42 = arith.addf %39, %41 : vector<48x64xf32>
    %c0_22 = arith.constant 0 : index
    %c0_23 = arith.constant 0 : index
    %43 = vector.load %arg8[%c0_22, %c0_23] : memref<48x64xf32, #tpu.memory_space<vmem>>, vector<48x64xf32>
    tpu.vector_store %arg8[%c0_22, %c0_23], %42 {strides = array<i32>} : memref<48x64xf32, #tpu.memory_space<vmem>>, vector<48x64xf32>,
    return
  }
  func.func @transform_0(%arg0: i32) -> (i32, i32) {
    %c0_i32 = arith.constant 0 : i32
    %c0_i32_0 = arith.constant 0 : i32
    return %arg0, %c0_i32 : i32, i32
  }
  func.func @transform_1(%arg0: i32) -> (i32, i32) {
    %c0_i32 = arith.constant 0 : i32
    %c0_i32_0 = arith.constant 0 : i32
    %c0_i32_1 = arith.constant 0 : i32
    return %c0_i32, %c0_i32_0 : i32, i32
  }
  func.func @transform_2(%arg0: i32) -> (i32, i32) {
    %c0_i32 = arith.constant 0 : i32
    %c0_i32_0 = arith.constant 0 : i32
    %c0_i32_1 = arith.constant 0 : i32
    return %c0_i32, %c0_i32_0 : i32, i32
  }
  func.func @transform_3(%arg0: i32) -> (i32, i32) {
    %c0_i32 = arith.constant 0 : i32
    %c0_i32_0 = arith.constant 0 : i32
    %c0_i32_1 = arith.constant 0 : i32
    return %c0_i32, %c0_i32_0 : i32, i32
  }
  func.func @transform_4(%arg0: i32) -> (i32, i32) {
    %c0_i32 = arith.constant 0 : i32
    %c0_i32_0 = arith.constant 0 : i32
    %c0_i32_1 = arith.constant 0 : i32
    return %c0_i32, %c0_i32_0 : i32, i32
  }
  func.func @transform_5(%arg0: i32) -> (i32, i32) {
    %c0_i32 = arith.constant 0 : i32
    %c0_i32_0 = arith.constant 0 : i32
    %c0_i32_1 = arith.constant 0 : i32
    return %c0_i32, %c0_i32_0 : i32, i32
  }
  func.func @transform_6(%arg0: i32) -> (i32, i32) {
    %c0_i32 = arith.constant 0 : i32
    %c0_i32_0 = arith.constant 0 : i32
    %c0_i32_1 = arith.constant 0 : i32
    return %c0_i32, %c0_i32_0 : i32, i32
  }
  func.func @transform_7(%arg0: i32) -> (i32, i32) {
    %c0_i32 = arith.constant 0 : i32
    %c0_i32_0 = arith.constant 0 : i32
    return %arg0, %c0_i32 : i32, i32
  }
}

</mosaic_0001>

<llo_original>
// kernel: tpu_custom_call.1
$region0: #{tpu_custom_call.1}
  #allocation0 [shape = 'u32[]', space=smem, size = 0x4, offset = 0x4, fixed_abs, tag = 'smem constant byte address 0x4 - core index']
  #allocation1 [shape = 'u32[144,128]{1,0:T(1,128)}', space=vmem, size = 0x12000, scoped, tag = 'internal scratch']
  %s0 = inlined_call_operand.vmem [shape: f32[48,64], index: 0, kind: input, shape index: {}]
  %s1 = inlined_call_operand.vmem [shape: f32[1,64], index: 1, kind: input, shape index: {}]
  %s2 = inlined_call_operand.vmem [shape: f32[1,64], index: 2, kind: input, shape index: {}]
  %s3 = inlined_call_operand.vmem [shape: bf16[64,256], index: 3, kind: input, shape index: {}]
  %s4 = inlined_call_operand.vmem [shape: f32[1,256], index: 4, kind: input, shape index: {}]
  %s5 = inlined_call_operand.vmem [shape: bf16[256,64], index: 5, kind: input, shape index: {}]
  %s6 = inlined_call_operand.vmem [shape: f32[1,64], index: 6, kind: input, shape index: {}]
  %s7 = inlined_call_operand.hbm [shape: f32[48,64], index: 7, kind: output, shape index: {}]
  %s8 = sld [smem:[#allocation0]]
  $region38: #{tpu_custom_call.1} parent=0
    _
  %s10 = ssub.s32 1, %s8
  %s11 = scalar_select 0, %s10, %s8
  $region1: #{tpu_custom_call.1} parent=0
    #allocation2 [shape = 'u8[24576]{0}', space=vmem, size = 0x6000, scoped, tag = 'output window, operand 0, single buffered']
    #allocation3 [shape = 's32[1]{0}', space=sflag, size = 0x4, scoped, tag = 'scoped memory for tpu_custom_call.1']
    %12 = vsyncpa [#allocation3], 0
    // Predicated region
    $region2: #{tpu_custom_call.1} parent=1 // pred_check
      _
    $region3: #{tpu_custom_call.1} parent=1 // pred_check_branch
      %14 = sbr.rel (0) target = $region5
    $region4: #{tpu_custom_call.1} parent=1 // pred_region
      _
    $region5: #{tpu_custom_call.1} parent=1 // pred_fallthru
      _
    // Predicated region
    $region6: #{tpu_custom_call.1} parent=1 // pred_check
      _
    $region7: #{tpu_custom_call.1} parent=1 // pred_check_branch
      %16 = sbr.rel (0) target = $region9
    $region8: #{tpu_custom_call.1} parent=1 // pred_region
      _
    $region9: #{tpu_custom_call.1} parent=1 // pred_fallthru
      _
    // Predicated region
    $region10: #{tpu_custom_call.1} parent=1 // pred_check
      _
    $region11: #{tpu_custom_call.1} parent=1 // pred_check_branch
      %18 = sbr.rel (0) target = $region13
    $region12: #{tpu_custom_call.1} parent=1 // pred_region
      _
    $region13: #{tpu_custom_call.1} parent=1 // pred_fallthru
      _
    // Predicated region
    $region14: #{tpu_custom_call.1} parent=1 // pred_check
      _
    $region15: #{tpu_custom_call.1} parent=1 // pred_check_branch
      %20 = sbr.rel (0) target = $region17
    $region16: #{tpu_custom_call.1} parent=1 // pred_region
      _
    $region17: #{tpu_custom_call.1} parent=1 // pred_fallthru
      _
    // Predicated region
    $region18: #{tpu_custom_call.1} parent=1 // pred_check
      _
    $region19: #{tpu_custom_call.1} parent=1 // pred_check_branch
      %22 = sbr.rel (0) target = $region21
    $region20: #{tpu_custom_call.1} parent=1 // pred_region
      _
    $region21: #{tpu_custom_call.1} parent=1 // pred_fallthru
      _
    // Predicated region
    $region22: #{tpu_custom_call.1} parent=1 // pred_check
      _
    $region23: #{tpu_custom_call.1} parent=1 // pred_check_branch
      %24 = sbr.rel (0) target = $region25
    $region24: #{tpu_custom_call.1} parent=1 // pred_region
      _
    $region25: #{tpu_custom_call.1} parent=1 // pred_fallthru
      _
    // Predicated region
    $region26: #{tpu_custom_call.1} parent=1 // pred_check
      _
    $region27: #{tpu_custom_call.1} parent=1 // pred_check_branch
      %26 = sbr.rel (0) target = $region29
    $region28: #{tpu_custom_call.1} parent=1 // pred_region
      _
    $region29: #{tpu_custom_call.1} parent=1 // pred_fallthru
      _
    %v28 = vld [vmem:[%s0] sm:$0xff]
    %v29 = vld [vmem:[%s0 + $0x8] sm:$0xff]
    %v30 = vld [vmem:[%s0 + $0x10] sm:$0xff]
    %v31 = vld [vmem:[%s0 + $0x18] sm:$0xff]
    %v32 = vld [vmem:[%s0 + $0x20] sm:$0xff]
    %v33 = vld [vmem:[%s0 + $0x28] sm:$0xff]
    %vm34 = vcmask 523264
    %v35 = vsel %vm34, %v28, 0.0
    %36 = vadd.xlane.f32.xlu0 %v35
    %v37 = vpop.xlane.xlu0 %36
    %v38 = vsel %vm34, %v29, 0.0
    %39 = vadd.xlane.f32.xlu0 %v38
    %v40 = vpop.xlane.xlu0 %39
    %v41 = vsel %vm34, %v30, 0.0
    %42 = vadd.xlane.f32.xlu0 %v41
    %v43 = vpop.xlane.xlu0 %42
    %v44 = vsel %vm34, %v31, 0.0
    %45 = vadd.xlane.f32.xlu0 %v44
    %v46 = vpop.xlane.xlu0 %45
    %v47 = vsel %vm34, %v32, 0.0
    %48 = vadd.xlane.f32.xlu0 %v47
    %v49 = vpop.xlane.xlu0 %48
    %v50 = vsel %vm34, %v33, 0.0
    %51 = vadd.xlane.f32.xlu0 %v50
    %v52 = vpop.xlane.xlu0 %51
    %v53 = vrcp.pop 64.0
    %v54 = vmul.f32 %v37, %v53
    %v55 = vmul.f32 %v40, %v53
    %v56 = vmul.f32 %v43, %v53
    %v57 = vmul.f32 %v46, %v53
    %v58 = vmul.f32 %v49, %v53
    %v59 = vmul.f32 %v52, %v53
    %v60 = vsub.f32 %v28, %v54
    %v61 = vsub.f32 %v29, %v55
    %v62 = vsub.f32 %v30, %v56
    %v63 = vsub.f32 %v31, %v57
    %v64 = vsub.f32 %v32, %v58
    %v65 = vsub.f32 %v33, %v59
    %v66 = vmul.f32 %v60, %v60
    %v67 = vmul.f32 %v61, %v61
    %v68 = vmul.f32 %v62, %v62
    %v69 = vmul.f32 %v63, %v63
    %v70 = vmul.f32 %v64, %v64
    %v71 = vmul.f32 %v65, %v65
    %v72 = vsel %vm34, %v66, 0.0
    %73 = vadd.xlane.f32.xlu0 %v72
    %v74 = vpop.xlane.xlu0 %73
    %v75 = vsel %vm34, %v67, 0.0
    %76 = vadd.xlane.f32.xlu0 %v75
    %v77 = vpop.xlane.xlu0 %76
    %v78 = vsel %vm34, %v68, 0.0
    %79 = vadd.xlane.f32.xlu0 %v78
    %v80 = vpop.xlane.xlu0 %79
    %v81 = vsel %vm34, %v69, 0.0
    %82 = vadd.xlane.f32.xlu0 %v81
    %v83 = vpop.xlane.xlu0 %82
    %v84 = vsel %vm34, %v70, 0.0
    %85 = vadd.xlane.f32.xlu0 %v84
    %v86 = vpop.xlane.xlu0 %85
    %v87 = vsel %vm34, %v71, 0.0
    %88 = vadd.xlane.f32.xlu0 %v87
    %v89 = vpop.xlane.xlu0 %88
    %v90 = vmul.f32 %v74, %v53
    %v91 = vmul.f32 %v77, %v53
    %v92 = vmul.f32 %v80, %v53
    %v93 = vmul.f32 %v83, %v53
    %v94 = vmul.f32 %v86, %v53
    %v95 = vmul.f32 %v89, %v53
    %v96 = vadd.f32 %v90, 1e-05
    %v97 = vadd.f32 %v91, 1e-05
    %v98 = vadd.f32 %v92, 1e-05
    %v99 = vadd.f32 %v93, 1e-05
    %v100 = vadd.f32 %v94, 1e-05
    %v101 = vadd.f32 %v95, 1e-05
    %v102 = vrsqrt.pop %v96
    %v103 = vrsqrt.pop %v97
    %v104 = vrsqrt.pop %v98
    %v105 = vrsqrt.pop %v99
    %v106 = vrsqrt.pop %v100
    %v107 = vrsqrt.pop %v101
    %v108 = vmul.f32 %v60, %v102
    %v109 = vmul.f32 %v61, %v103
    %v110 = vmul.f32 %v62, %v104
    %v111 = vmul.f32 %v63, %v105
    %v112 = vmul.f32 %v64, %v106
    %v113 = vmul.f32 %v65, %v107
    %v114 = vld [vmem:[%s1] sm:$0x1]
    %v116 = vlaneseq
    %v117 = vshrl.u32 %v116, 7
    %v118 = vsub.s32 0, %v117
    %v119 = vrot.slane %v114, %v118
    %v121 = vmul.f32 %v108, %v119
    %v122 = vmul.f32 %v109, %v119
    %v123 = vmul.f32 %v110, %v119
    %v124 = vmul.f32 %v111, %v119
    %v125 = vmul.f32 %v112, %v119
    %v126 = vmul.f32 %v113, %v119
    %v127 = vld [vmem:[%s2] sm:$0x1]
    %v129 = vlaneseq
    %v130 = vshrl.u32 %v129, 7
    %v131 = vsub.s32 0, %v130
    %v132 = vrot.slane %v127, %v131
    %v134 = vadd.f32 %v121, %v132
    %v135 = vadd.f32 %v122, %v132
    %v136 = vadd.f32 %v123, %v132
    %v137 = vadd.f32 %v124, %v132
    %v138 = vadd.f32 %v125, %v132
    %v139 = vadd.f32 %v126, %v132
    %v140 = vpack.c.bf16 %v135, %v134
    %v141 = vpack.c.bf16 %v137, %v136
    %v142 = vpack.c.bf16 %v139, %v138
    %v143 = vld [vmem:[%s3] sm:$0xff]
    %v144 = vld [vmem:[%s3 + $0x8] sm:$0xff]
    %v145 = vld [vmem:[%s3 + $0x10] sm:$0xff]
    %v146 = vld [vmem:[%s3 + $0x18] sm:$0xff]
    %v147 = vld [vmem:[%s3 + $0x20] sm:$0xff]
    %v148 = vld [vmem:[%s3 + $0x28] sm:$0xff]
    %v149 = vld [vmem:[%s3 + $0x30] sm:$0xff]
    %v150 = vld [vmem:[%s3 + $0x38] sm:$0xff]
    %v151 = vld [vmem:[%s4] sm:$0x3]
    %v153 = vlaneseq
    %v154 = vshrl.u32 %v153, 7
    %v155 = vsub.s32 0, %v154
    %v156 = vrot.slane %v151, %v155
    %v157 = vlaneseq
    %v158 = vshrl.u32 %v157, 7
    %v159 = vsub.s32 1, %v158
    %v160 = vrot.slane %v151, %v159
    %v171 = vunpack.c.l.b16 %v143
    %v172 = vunpack.c.h.b16 %v143
    %v173 = vunpack.c.l.b16 %v144
    %v174 = vunpack.c.h.b16 %v144
    %v175 = vunpack.c.l.b16 %v145
    %v176 = vunpack.c.h.b16 %v145
    %v177 = vunpack.c.l.b16 %v146
    %v178 = vunpack.c.h.b16 %v146
    %v179 = vunpack.c.l.b16 %v147
    %v180 = vunpack.c.h.b16 %v147
    %v181 = vunpack.c.l.b16 %v148
    %v182 = vunpack.c.h.b16 %v148
    %v183 = vunpack.c.l.b16 %v149
    %v184 = vunpack.c.h.b16 %v149
    %v185 = vunpack.c.l.b16 %v150
    %v186 = vunpack.c.h.b16 %v150
    %v187 = vpack.c.b16 %v173, %v171
    %v188 = vpack.c.b16 %v174, %v172
    %v189 = vpack.c.b16 %v177, %v175
    %v190 = vpack.c.b16 %v178, %v176
    %v191 = vpack.c.b16 %v181, %v179
    %v192 = vpack.c.b16 %v182, %v180
    %v193 = vpack.c.b16 %v185, %v183
    %v194 = vpack.c.b16 %v186, %v184
    %v204 = vsel %vm34, %v140, 0
    %v207 = vsel %vm34, %v141, 0
    %v210 = vsel %vm34, %v142, 0
    %212 = vmatprep.subr.bf16.mxu0 %v188
    %213 = vmatpush1.bf16.msra.mxu0 %v187
    %214 = vmatprep.subr.bf16.mxu0 %v190
    %215 = vmatpush1.bf16.msra.mxu0 %v189
    %216 = vmatprep.subr.bf16.mxu0 %v192
    %217 = vmatpush1.bf16.msra.mxu0 %v191
    %218 = vmatprep.subr.bf16.mxu0 %v194
    %219 = vmatpush1.bf16.msra.mxu0 %v193
    %220 = vmatprep.subr.bf16.mxu0 0
    %221 = vmatpush1.bf16.msra.mxu0 0
    %222 = vmatprep.subr.bf16.mxu0 0
    %223 = vmatpush1.bf16.msra.mxu0 0
    %224 = vmatprep.subr.bf16.mxu0 0
    %225 = vmatpush1.bf16.msra.mxu0 0
    %226 = vmatprep.subr.bf16.mxu0 0
    %227 = vmatpush1.bf16.msra.mxu0 0
    %228 = vmatprep.subr.bf16.mxu0 0
    %229 = vmatpush1.bf16.msra.mxu0 0
    %230 = vmatprep.subr.bf16.mxu0 0
    %231 = vmatpush1.bf16.msra.mxu0 0
    %232 = vmatprep.subr.bf16.mxu0 0
    %233 = vmatpush1.bf16.msra.mxu0 0
    %234 = vmatprep.subr.bf16.mxu0 0
    %235 = vmatpush1.bf16.msra.mxu0 0
    %236 = vmatprep.subr.bf16.mxu0 0
    %237 = vmatpush1.bf16.msra.mxu0 0
    %238 = vmatprep.subr.bf16.mxu0 0
    %239 = vmatpush1.bf16.msra.mxu0 0
    %240 = vmatprep.subr.bf16.mxu0 0
    %241 = vmatpush1.bf16.msra.mxu0 0
    %242 = vmatprep.subr.bf16.mxu0 0
    %243 = vmatpush1.bf16.msra.mxu0 0
    %244 = vmatprep.mubr.bf16.mxu0 0
    %245 = vmatmul.mubr.bf16.gmra.mrb[0].mxu0 %v204
    %v246 = vpop.f32.mrb[0].mxu0
    %v247 = vadd.f32 %v156, %v246
    %v248 = vpop.f32.mrb[0].mxu0
    %v249 = vadd.f32 %v160, %v248
    %v250 = vpop.f32.mrb[0].mxu0
    %v251 = vadd.f32 %v156, %v250
    %v252 = vpop.f32.mrb[0].mxu0
    %v253 = vadd.f32 %v160, %v252
    %254 = vmatprep.mubr.bf16.mxu0 0
    %255 = vmatmul.mubr.bf16.gmra.mrb[0].mxu0 %v207
    %v256 = vpop.f32.mrb[0].mxu0
    %v257 = vadd.f32 %v156, %v256
    %v258 = vpop.f32.mrb[0].mxu0
    %v259 = vadd.f32 %v160, %v258
    %v260 = vpop.f32.mrb[0].mxu0
    %v261 = vadd.f32 %v156, %v260
    %v262 = vpop.f32.mrb[0].mxu0
    %v263 = vadd.f32 %v160, %v262
    %264 = vmatprep.mubr.bf16.mxu0 0
    %265 = vmatmul.mubr.bf16.gmra.mrb[0].mxu0 %v210
    %v266 = vpop.f32.mrb[0].mxu0
    %v267 = vadd.f32 %v156, %v266
    %v268 = vpop.f32.mrb[0].mxu0
    %v269 = vadd.f32 %v160, %v268
    %v270 = vpop.f32.mrb[0].mxu0
    %v271 = vadd.f32 %v156, %v270
    %v272 = vpop.f32.mrb[0].mxu0
    %v273 = vadd.f32 %v160, %v272
    %274 = vdwg.mxu0
    %v275 = vmul.f32 %v247, 0.5
    %v276 = vmul.f32 %v249, 0.5
    %v277 = vmul.f32 %v251, 0.5
    %v278 = vmul.f32 %v253, 0.5
    %v279 = vmul.f32 %v257, 0.5
    %v280 = vmul.f32 %v259, 0.5
    %v281 = vmul.f32 %v261, 0.5
    %v282 = vmul.f32 %v263, 0.5
    %v283 = vmul.f32 %v267, 0.5
    %v284 = vmul.f32 %v269, 0.5
    %v285 = vmul.f32 %v271, 0.5
    %v286 = vmul.f32 %v273, 0.5
    %v287 = vmul.f32 %v247, 0.70710677
    %v288 = vmul.f32 %v249, 0.70710677
    %v289 = vmul.f32 %v251, 0.70710677
    %v290 = vmul.f32 %v253, 0.70710677
    %v291 = vmul.f32 %v257, 0.70710677
    %v292 = vmul.f32 %v259, 0.70710677
    %v293 = vmul.f32 %v261, 0.70710677
    %v294 = vmul.f32 %v263, 0.70710677
    %v295 = vmul.f32 %v267, 0.70710677
    %v296 = vmul.f32 %v269, 0.70710677
    %v297 = vmul.f32 %v271, 0.70710677
    %v298 = vmul.f32 %v273, 0.70710677
    %v299 = verf.f32.pop %v287
    %v300 = verf.f32.pop %v288
    %v301 = verf.f32.pop %v289
    %v302 = verf.f32.pop %v290
    %v303 = verf.f32.pop %v291
    %v304 = verf.f32.pop %v292
    %v305 = verf.f32.pop %v293
    %v306 = verf.f32.pop %v294
    %v307 = verf.f32.pop %v295
    %v308 = verf.f32.pop %v296
    %v309 = verf.f32.pop %v297
    %v310 = verf.f32.pop %v298
    %v311 = vadd.f32 %v299, 1.0
    %v312 = vadd.f32 %v300, 1.0
    %v313 = vadd.f32 %v301, 1.0
    %v314 = vadd.f32 %v302, 1.0
    %v315 = vadd.f32 %v303, 1.0
    %v316 = vadd.f32 %v304, 1.0
    %v317 = vadd.f32 %v305, 1.0
    %v318 = vadd.f32 %v306, 1.0
    %v319 = vadd.f32 %v307, 1.0
    %v320 = vadd.f32 %v308, 1.0
    %v321 = vadd.f32 %v309, 1.0
    %v322 = vadd.f32 %v310, 1.0
    %v323 = vmul.f32 %v275, %v311
    %v324 = vmul.f32 %v276, %v312
    %v325 = vmul.f32 %v277, %v313
    %v326 = vmul.f32 %v278, %v314
    %v327 = vmul.f32 %v279, %v315
    %v328 = vmul.f32 %v280, %v316
    %v329 = vmul.f32 %v281, %v317
    %v330 = vmul.f32 %v282, %v318
    %v331 = vmul.f32 %v283, %v319
    %v332 = vmul.f32 %v284, %v320
    %v333 = vmul.f32 %v285, %v321
    %v334 = vmul.f32 %v286, %v322
    %v335 = vpack.c.bf16 %v325, %v323
    %v336 = vpack.c.bf16 %v326, %v324
    %v337 = vpack.c.bf16 %v329, %v327
    %v338 = vpack.c.bf16 %v330, %v328
    %v339 = vpack.c.bf16 %v333, %v331
    %v340 = vpack.c.bf16 %v334, %v332
    %v341 = vld [vmem:[%s5] sm:$0xf]
    %v342 = vld [vmem:[%s5 + $0x4] sm:$0xf]
    %v343 = vld [vmem:[%s5 + $0x8] sm:$0xf]
    %v344 = vld [vmem:[%s5 + $0xc] sm:$0xf]
    %v345 = vld [vmem:[%s5 + $0x10] sm:$0xf]
    %v346 = vld [vmem:[%s5 + $0x14] sm:$0xf]
    %v347 = vld [vmem:[%s5 + $0x18] sm:$0xf]
    %v348 = vld [vmem:[%s5 + $0x1c] sm:$0xf]
    %v349 = vld [vmem:[%s5 + $0x20] sm:$0xf]
    %v350 = vld [vmem:[%s5 + $0x24] sm:$0xf]
    %v351 = vld [vmem:[%s5 + $0x28] sm:$0xf]
    %v352 = vld [vmem:[%s5 + $0x2c] sm:$0xf]
    %v353 = vld [vmem:[%s5 + $0x30] sm:$0xf]
    %v354 = vld [vmem:[%s5 + $0x34] sm:$0xf]
    %v355 = vld [vmem:[%s5 + $0x38] sm:$0xf]
    %v356 = vld [vmem:[%s5 + $0x3c] sm:$0xf]
    %v357 = vld [vmem:[%s5 + $0x40] sm:$0xf]
    %v358 = vld [vmem:[%s5 + $0x44] sm:$0xf]
    %v359 = vld [vmem:[%s5 + $0x48] sm:$0xf]
    %v360 = vld [vmem:[%s5 + $0x4c] sm:$0xf]
    %v361 = vld [vmem:[%s5 + $0x50] sm:$0xf]
    %v362 = vld [vmem:[%s5 + $0x54] sm:$0xf]
    %v363 = vld [vmem:[%s5 + $0x58] sm:$0xf]
    %v364 = vld [vmem:[%s5 + $0x5c] sm:$0xf]
    %v365 = vld [vmem:[%s5 + $0x60] sm:$0xf]
    %v366 = vld [vmem:[%s5 + $0x64] sm:$0xf]
    %v367 = vld [vmem:[%s5 + $0x68] sm:$0xf]
    %v368 = vld [vmem:[%s5 + $0x6c] sm:$0xf]
    %v369 = vld [vmem:[%s5 + $0x70] sm:$0xf]
    %v370 = vld [vmem:[%s5 + $0x74] sm:$0xf]
    %v371 = vld [vmem:[%s5 + $0x78] sm:$0xf]
    %v372 = vld [vmem:[%s5 + $0x7c] sm:$0xf]
    %v373 = vld [vmem:[%s6] sm:$0x1]
    %v375 = vlaneseq
    %v376 = vshrl.u32 %v375, 7
    %v377 = vsub.s32 0, %v376
    %v378 = vrot.slane %v373, %v377
    %v412 = vunpack.c.l.b16 %v341
    %v413 = vunpack.c.l.b16 %v342
    %v414 = vunpack.c.l.b16 %v343
    %v415 = vunpack.c.l.b16 %v344
    %v416 = vunpack.c.l.b16 %v345
    %v417 = vunpack.c.l.b16 %v346
    %v418 = vunpack.c.l.b16 %v347
    %v419 = vunpack.c.l.b16 %v348
    %v420 = vunpack.c.l.b16 %v349
    %v421 = vunpack.c.l.b16 %v350
    %v422 = vunpack.c.l.b16 %v351
    %v423 = vunpack.c.l.b16 %v352
    %v424 = vunpack.c.l.b16 %v353
    %v425 = vunpack.c.l.b16 %v354
    %v426 = vunpack.c.l.b16 %v355
    %v427 = vunpack.c.l.b16 %v356
    %v428 = vunpack.c.l.b16 %v357
    %v429 = vunpack.c.l.b16 %v358
    %v430 = vunpack.c.l.b16 %v359
    %v431 = vunpack.c.l.b16 %v360
    %v432 = vunpack.c.l.b16 %v361
    %v433 = vunpack.c.l.b16 %v362
    %v434 = vunpack.c.l.b16 %v363
    %v435 = vunpack.c.l.b16 %v364
    %v436 = vunpack.c.l.b16 %v365
    %v437 = vunpack.c.l.b16 %v366
    %v438 = vunpack.c.l.b16 %v367
    %v439 = vunpack.c.l.b16 %v368
    %v440 = vunpack.c.l.b16 %v369
    %v441 = vunpack.c.l.b16 %v370
    %v442 = vunpack.c.l.b16 %v371
    %v443 = vunpack.c.l.b16 %v372
    %v444 = vpack.c.b16 %v413, %v412
    %v445 = vpack.c.b16 %v415, %v414
    %v446 = vpack.c.b16 %v417, %v416
    %v447 = vpack.c.b16 %v419, %v418
    %v448 = vpack.c.b16 %v421, %v420
    %v449 = vpack.c.b16 %v423, %v422
    %v450 = vpack.c.b16 %v425, %v424
    %v451 = vpack.c.b16 %v427, %v426
    %v452 = vpack.c.b16 %v429, %v428
    %v453 = vpack.c.b16 %v431, %v430
    %v454 = vpack.c.b16 %v433, %v432
    %v455 = vpack.c.b16 %v435, %v434
    %v456 = vpack.c.b16 %v437, %v436
    %v457 = vpack.c.b16 %v439, %v438
    %v458 = vpack.c.b16 %v441, %v440
    %v459 = vpack.c.b16 %v443, %v442
    %476 = vmatprep.subr.bf16.mxu0 0
    %477 = vmatpush1.bf16.msra.mxu0 %v444
    %478 = vmatprep.subr.bf16.mxu0 0
    %479 = vmatpush1.bf16.msra.mxu0 %v445
    %480 = vmatprep.subr.bf16.mxu0 0
    %481 = vmatpush1.bf16.msra.mxu0 %v446
    %482 = vmatprep.subr.bf16.mxu0 0
    %483 = vmatpush1.bf16.msra.mxu0 %v447
    %484 = vmatprep.subr.bf16.mxu0 0
    %485 = vmatpush1.bf16.msra.mxu0 %v448
    %486 = vmatprep.subr.bf16.mxu0 0
    %487 = vmatpush1.bf16.msra.mxu0 %v449
    %488 = vmatprep.subr.bf16.mxu0 0
    %489 = vmatpush1.bf16.msra.mxu0 %v450
    %490 = vmatprep.subr.bf16.mxu0 0
    %491 = vmatpush1.bf16.msra.mxu0 %v451
    %492 = vmatprep.subr.bf16.mxu0 0
    %493 = vmatpush1.bf16.msra.mxu0 %v452
    %494 = vmatprep.subr.bf16.mxu0 0
    %495 = vmatpush1.bf16.msra.mxu0 %v453
    %496 = vmatprep.subr.bf16.mxu0 0
    %497 = vmatpush1.bf16.msra.mxu0 %v454
    %498 = vmatprep.subr.bf16.mxu0 0
    %499 = vmatpush1.bf16.msra.mxu0 %v455
    %500 = vmatprep.subr.bf16.mxu0 0
    %501 = vmatpush1.bf16.msra.mxu0 %v456
    %502 = vmatprep.subr.bf16.mxu0 0
    %503 = vmatpush1.bf16.msra.mxu0 %v457
    %504 = vmatprep.subr.bf16.mxu0 0
    %505 = vmatpush1.bf16.msra.mxu0 %v458
    %506 = vmatprep.subr.bf16.mxu0 0
    %507 = vmatpush1.bf16.msra.mxu0 %v459
    %508 = vmatprep.mubr.bf16.mxu0 %v336
    %509 = vmatmul.mubr.bf16.gmra.mrb[0].mxu0 %v335
    %v510 = vpop.f32.mrb[0].mxu0
    %v511 = vadd.f32 %v378, %v510
    %v512 = vpop.f32.mrb[0].mxu0
    %v513 = vpop.f32.mrb[0].mxu0
    %v514 = vadd.f32 %v378, %v513
    %v515 = vpop.f32.mrb[0].mxu0
    %516 = vmatprep.mubr.bf16.mxu0 %v338
    %517 = vmatmul.mubr.bf16.gmra.mrb[0].mxu0 %v337
    %v518 = vpop.f32.mrb[0].mxu0
    %v519 = vadd.f32 %v378, %v518
    %v520 = vpop.f32.mrb[0].mxu0
    %v521 = vpop.f32.mrb[0].mxu0
    %v522 = vadd.f32 %v378, %v521
    %v523 = vpop.f32.mrb[0].mxu0
    %524 = vmatprep.mubr.bf16.mxu0 %v340
    %525 = vmatmul.mubr.bf16.gmra.mrb[0].mxu0 %v339
    %v526 = vpop.f32.mrb[0].mxu0
    %v527 = vadd.f32 %v378, %v526
    %v528 = vpop.f32.mrb[0].mxu0
    %v529 = vpop.f32.mrb[0].mxu0
    %v530 = vadd.f32 %v378, %v529
    %v531 = vpop.f32.mrb[0].mxu0
    %532 = vdwg.mxu0
    %533 = vst.msk [vmem:[#allocation2] sm:$0xff] %vm34, %v511
    %534 = vst.msk [vmem:[#allocation2 + $0x8] sm:$0xff] %vm34, %v514
    %535 = vst.msk [vmem:[#allocation2 + $0x10] sm:$0xff] %vm34, %v519
    %536 = vst.msk [vmem:[#allocation2 + $0x18] sm:$0xff] %vm34, %v522
    %537 = vst.msk [vmem:[#allocation2 + $0x20] sm:$0xff] %vm34, %v527
    %538 = vst.msk [vmem:[#allocation2 + $0x28] sm:$0xff] %vm34, %v530
    // Predicated region
    $region30: #{tpu_custom_call.1} parent=1 // pred_check
      _
    $region31: #{tpu_custom_call.1} parent=1 // pred_check_branch
      %540 = sbr.rel (0) target = $region33
    $region32: #{tpu_custom_call.1} parent=1 // pred_region
      %s542 = ssub.s32 768, 768
      %543 = vsyncadd [#allocation3], %s542
      %s544 = sshll.u32 [#allocation2], 4
      %s545 = int_to_ptr.vmem [resolvable:$true] %s544
      %550 = dma.vmem_to_hbm [thread:$0]  %s545, 768, %s7, [#allocation3], 128, 128, 8
    $region33: #{tpu_custom_call.1} parent=1 // pred_fallthru
      _
    // Predicated region
    $region34: #{tpu_custom_call.1} parent=1 // pred_check
      _
    $region35: #{tpu_custom_call.1} parent=1 // pred_check_branch
      %552 = sbr.rel (0) target = $region37
    $region36: #{tpu_custom_call.1} parent=1 // pred_region
      %553 = dma.done [#allocation3], 768
    $region37: #{tpu_custom_call.1} parent=1 // pred_fallthru
      _
    %554 = vsyncpa [#allocation3], 1

</llo_original>
